<compile_context>
chip_gen: v6e
topology: v6e:2x2x1
jax: 0.10.0
libtpu: 0.0.40
codegen_flags: <defaults>
</compile_context>

<pallas_src>
import jax
import jax.numpy as jnp
from jax.experimental import pallas as pl
from jax.experimental.pallas import tpu as pltpu


def transform_kernel(scale_ref, bias_ref, x_ref, o_ref):
    # scale_ref / bias_ref: (row_tile, 1) f32, broadcast over the lane axis.
    # x_ref / o_ref:        (row_tile, col_tile) tile of the flattened image.
    x = x_ref[...].astype(jnp.float32)
    o_ref[...] = (x * scale_ref[...] + bias_ref[...]).astype(o_ref.dtype)


def _round_up(x, m):
    return ((x + m - 1) // m) * m


def _sublane(dtype):
    # Sub-32-bit dtypes pack along sublanes: 8 (4B) / 16 (2B) / 32 (1B).
    return {4: 8, 2: 16, 1: 32}.get(jnp.dtype(dtype).itemsize, 8)


def _vmem_capacity_bytes():
    try:
        cap = getattr(pltpu.get_tpu_info(), "vmem_capacity_bytes", None)
        if cap:
            return int(cap)
    except Exception:  # interpret mode / non-TPU tracing
        pass
    return 64 * 1024 * 1024  # conservative default (v7x per-TensorCore VMEM)


def _pick_tiles(R, L, sublane, tile_elem_cap, split_rows):
    """Pick (row_tile, col_tile) for a (R, L) array under a per-tile element cap.

    Preference: full-row (fully contiguous HBM DMA) tiles, shrinking the row
    axis to fit; only split the lane axis (128-aligned, edge block masked)
    when even a single sublane-group of full rows exceeds the budget.
    """
    LANE = 128
    row_base = min(R, sublane)  # smallest legal row block
    if row_base * L <= tile_elem_cap:
        col_tile = L  # full row -> one contiguous HBM transfer per block
        rows_fit = max((tile_elem_cap // L) // sublane * sublane, row_base)
        if rows_fit >= R:
            row_tile = R
            if split_rows and R >= 2 * sublane:
                # >=2 row blocks so both v7x TensorCores get work on the
                # "parallel" row axis (negligible overhead on 1-TC chips).
                row_tile = _round_up(pl.cdiv(R, 2), sublane)
        else:
            row_tile = rows_fit
        return row_tile, col_tile
    # Rows too wide for VMEM: split the lane axis into 128-aligned chunks.
    col_tile = max(LANE, (tile_elem_cap // row_base) // LANE * LANE)
    return row_base, col_tile


def transform(img, mean, std):
    N, C, H, W = img.shape
    R, L = N * C, H * W

    in_dtype = img.dtype
    out_dtype = in_dtype if jnp.issubdtype(in_dtype, jnp.floating) else jnp.float32

    # Flatten to a lane-dense 2-D view (free for contiguous NCHW).
    x2d = img.reshape(R, L)

    # Per-channel affine, one row per (n, c). Robust to scalar / (1,) mean/std.
    mean32 = jnp.broadcast_to(jnp.asarray(mean, jnp.float32).reshape(-1), (C,))
    std32 = jnp.broadcast_to(jnp.asarray(std, jnp.float32).reshape(-1), (C,))
    scale_c = 0.5 / std32                   # (C,)
    bias_c = (0.5 - mean32) / std32         # (C,)
    scale = jnp.broadcast_to(scale_c[None, :], (N, C)).reshape(R, 1)
    bias = jnp.broadcast_to(bias_c[None, :], (N, C)).reshape(R, 1)

    # Generation-aware VMEM budget: in + out, each double-buffered (4 tiles).
    vmem_cap = _vmem_capacity_bytes()
    ws_budget = min(max(vmem_cap // 4, 16 * 1024 * 1024), 48 * 1024 * 1024)
    vmem_limit = min(max(vmem_cap // 2, 32 * 1024 * 1024), 64 * 1024 * 1024)

    bytes_per_elem = jnp.dtype(in_dtype).itemsize + jnp.dtype(out_dtype).itemsize
    tile_elem_cap = ws_budget // (2 * bytes_per_elem)   # 2x for double-buffering
    sublane = max(_sublane(in_dtype), _sublane(out_dtype))
    split_rows = R * L * bytes_per_elem > (1 << 20)      # only bother on big inputs

    row_tile, col_tile = _pick_tiles(R, L, sublane, tile_elem_cap, split_rows)
    grid = (pl.cdiv(R, row_tile), pl.cdiv(L, col_tile))  # edge blocks are masked

    out2d = pl.pallas_call(
        transform_kernel,
        out_shape=jax.ShapeDtypeStruct((R, L), out_dtype),
        grid_spec=pltpu.PrefetchScalarGridSpec(
            num_scalar_prefetch=0,
            grid=grid,
            in_specs=[
                pl.BlockSpec((row_tile, 1), lambda i, j: (i, 0)),          # scale
                pl.BlockSpec((row_tile, 1), lambda i, j: (i, 0)),          # bias
                pl.BlockSpec((row_tile, col_tile), lambda i, j: (i, j)),   # img
            ],
            out_specs=pl.BlockSpec((row_tile, col_tile), lambda i, j: (i, j)),
        ),
        compiler_params=pltpu.CompilerParams(
            dimension_semantics=("parallel", "parallel"),
            vmem_limit_bytes=vmem_limit,
        ),
    )(scale, bias, x2d)

    return out2d.reshape(N, C, H, W)


if __name__ == "__main__":
    key = jax.random.PRNGKey(0)
    # Image in [-1, 1] (the (img + 1)/2 step implies this), NCHW with C=3 to
    # match the module's default ImageNet mean/std.
    img = jax.random.uniform(key, (2, 3, 16, 16), dtype=jnp.float32,
                             minval=-1.0, maxval=1.0)

    # Deterministic parameters from the module's __init__ defaults.
    mean = jnp.array([0.485, 0.456, 0.406], dtype=jnp.float32)
    std = jnp.array([0.229, 0.224, 0.225], dtype=jnp.float32)

    out = jax.block_until_ready(transform(img, mean, std))

    # Sanity check against plain-JAX reference.
    ref = ((img + 1.0) / 2.0 - mean[None, :, None, None]) / std[None, :, None, None]
    assert out.shape == img.shape and out.dtype == img.dtype
    assert jnp.max(jnp.abs(out - ref)) < 1e-5

    print("KERNEL_OK")
</pallas_src>

<mosaic_0001>
module attributes {stable_mosaic.version = 11 : i64} {
  func.func @transform_kernel(%arg0: i32, %arg1: i32, %arg2: memref<6x1xf32, #tpu.memory_space<vmem>>, %arg3: memref<6x1xf32, #tpu.memory_space<vmem>>, %arg4: memref<6x256xf32, #tpu.memory_space<vmem>>, %arg5: memref<6x256xf32, #tpu.memory_space<vmem>>) attributes {dimension_semantics = [#tpu.dimension_semantics<parallel>, #tpu.dimension_semantics<parallel>], iteration_bounds = array<i64: 1, 1>, scalar_prefetch = 0 : i64, scratch_operands = 0 : i64, tpu.core_type = #tpu.core_type<tc>, window_params = [{transform_indices = @transform_0, window_bounds = array<i64: 6, 1>}, {transform_indices = @transform_1, window_bounds = array<i64: 6, 1>}, {transform_indices = @transform_2, window_bounds = array<i64: 6, 256>}, {transform_indices = @transform_3, window_bounds = array<i64: 6, 256>}]} {
    %c0 = arith.constant 0 : index
    %c0_0 = arith.constant 0 : index
    %0 = vector.load %arg4[%c0, %c0_0] : memref<6x256xf32, #tpu.memory_space<vmem>>, vector<6x256xf32>
    %c0_1 = arith.constant 0 : index
    %c0_2 = arith.constant 0 : index
    %1 = vector.load %arg2[%c0_1, %c0_2] : memref<6x1xf32, #tpu.memory_space<vmem>>, vector<6x1xf32>
    %2 = vector.broadcast %1 : vector<6x1xf32> to vector<6x256xf32>
    %3 = arith.mulf %0, %2 : vector<6x256xf32>
    %c0_3 = arith.constant 0 : index
    %c0_4 = arith.constant 0 : index
    %4 = vector.load %arg3[%c0_3, %c0_4] : memref<6x1xf32, #tpu.memory_space<vmem>>, vector<6x1xf32>
    %5 = vector.broadcast %4 : vector<6x1xf32> to vector<6x256xf32>
    %6 = arith.addf %3, %5 : vector<6x256xf32>
    %c0_5 = arith.constant 0 : index
    %c0_6 = arith.constant 0 : index
    %7 = vector.load %arg5[%c0_5, %c0_6] : memref<6x256xf32, #tpu.memory_space<vmem>>, vector<6x256xf32>
    tpu.vector_store %arg5[%c0_5, %c0_6], %6 {strides = array<i32>} : memref<6x256xf32, #tpu.memory_space<vmem>>, vector<6x256xf32>,
    return
  }
  func.func @transform_0(%arg0: i32, %arg1: i32) -> (i32, i32) {
    %c0_i32 = arith.constant 0 : i32
    %c0_i32_0 = arith.constant 0 : i32
    return %arg0, %c0_i32 : i32, i32
  }
  func.func @transform_1(%arg0: i32, %arg1: i32) -> (i32, i32) {
    %c0_i32 = arith.constant 0 : i32
    %c0_i32_0 = arith.constant 0 : i32
    return %arg0, %c0_i32 : i32, i32
  }
  func.func @transform_2(%arg0: i32, %arg1: i32) -> (i32, i32) {
    %c0_i32 = arith.constant 0 : i32
    return %arg0, %arg1 : i32, i32
  }
  func.func @transform_3(%arg0: i32, %arg1: i32) -> (i32, i32) {
    %c0_i32 = arith.constant 0 : i32
    return %arg0, %arg1 : i32, i32
  }
}

</mosaic_0001>

<llo_original>
// kernel: tpu_custom_call.1
$region0: #{tpu_custom_call.1}
  #allocation0 [shape = 'u32[]', space=smem, size = 0x4, offset = 0x4, fixed_abs, tag = 'smem constant byte address 0x4 - core index']
  #allocation1 [shape = 'u32[144,128]{1,0:T(1,128)}', space=vmem, size = 0x12000, scoped, tag = 'internal scratch']
  %s0 = inlined_call_operand.vmem [shape: f32[6,1], index: 0, kind: input, shape index: {}]
  %s1 = inlined_call_operand.vmem [shape: f32[6,1], index: 1, kind: input, shape index: {}]
  %s2 = inlined_call_operand.vmem [shape: f32[6,256], index: 2, kind: input, shape index: {}]
  %s3 = inlined_call_operand.hbm [shape: f32[6,256], index: 3, kind: output, shape index: {}]
  %s4 = sld [smem:[#allocation0]]
  $region22: #{tpu_custom_call.1} parent=0
    _
  %s6 = ssub.s32 1, %s4
  %s7 = scalar_select 0, %s6, %s4
  $region1: #{tpu_custom_call.1} parent=0
    #allocation2 [shape = 'u8[8192]{0}', space=vmem, size = 0x2000, scoped, tag = 'output window, operand 0, single buffered']
    #allocation3 [shape = 's32[1]{0}', space=sflag, size = 0x4, scoped, tag = 'scoped memory for tpu_custom_call.1']
    %8 = vsyncpa [#allocation3], 0
    // Predicated region
    $region2: #{tpu_custom_call.1} parent=1 // pred_check
      _
    $region3: #{tpu_custom_call.1} parent=1 // pred_check_branch
      %10 = sbr.rel (0) target = $region5
    $region4: #{tpu_custom_call.1} parent=1 // pred_region
      _
    $region5: #{tpu_custom_call.1} parent=1 // pred_fallthru
      _
    // Predicated region
    $region6: #{tpu_custom_call.1} parent=1 // pred_check
      _
    $region7: #{tpu_custom_call.1} parent=1 // pred_check_branch
      %12 = sbr.rel (0) target = $region9
    $region8: #{tpu_custom_call.1} parent=1 // pred_region
      _
    $region9: #{tpu_custom_call.1} parent=1 // pred_fallthru
      _
    // Predicated region
    $region10: #{tpu_custom_call.1} parent=1 // pred_check
      _
    $region11: #{tpu_custom_call.1} parent=1 // pred_check_branch
      %14 = sbr.rel (0) target = $region13
    $region12: #{tpu_custom_call.1} parent=1 // pred_region
      _
    $region13: #{tpu_custom_call.1} parent=1 // pred_fallthru
      _
    %v15 = vld [vmem:[%s2] sm:$0x3f]
    %v16 = vld [vmem:[%s2 + $0x8] sm:$0x3f]
    %v17 = vld [vmem:[%s0] sm:$0x3f]
    %19 = vset.pattern.permute.xlu0 0
    %20 = vperm.xlu0 %19, %v17
    %v21 = vpop.permute.xlu0 %20
    %v23 = vmul.f32 %v15, %v21
    %v24 = vmul.f32 %v16, %v21
    %v25 = vld [vmem:[%s1] sm:$0x3f]
    %27 = vset.pattern.permute.xlu0 0
    %28 = vperm.xlu0 %27, %v25
    %v29 = vpop.permute.xlu0 %28
    %v31 = vadd.f32 %v23, %v29
    %v32 = vadd.f32 %v24, %v29
    %33 = vst [vmem:[#allocation2] sm:$0x3f] %v31
    %34 = vst [vmem:[#allocation2 + $0x8] sm:$0x3f] %v32
    // Predicated region
    $region14: #{tpu_custom_call.1} parent=1 // pred_check
      _
    $region15: #{tpu_custom_call.1} parent=1 // pred_check_branch
      %36 = sbr.rel (0) target = $region17
    $region16: #{tpu_custom_call.1} parent=1 // pred_region
      %s38 = ssub.s32 256, 256
      %39 = vsyncadd [#allocation3], %s38
      %s41 = sshll.u32 [#allocation2], 4
      %s42 = int_to_ptr.vmem [resolvable:$true] %s41
      %44 = dma.vmem_to_hbm [thread:$0]  %s42, 256, %s3, [#allocation3]
    $region17: #{tpu_custom_call.1} parent=1 // pred_fallthru
      _
    // Predicated region
    $region18: #{tpu_custom_call.1} parent=1 // pred_check
      _
    $region19: #{tpu_custom_call.1} parent=1 // pred_check_branch
      %46 = sbr.rel (0) target = $region21
    $region20: #{tpu_custom_call.1} parent=1 // pred_region
      %47 = dma.done [#allocation3], 256
    $region21: #{tpu_custom_call.1} parent=1 // pred_fallthru
      _
    %48 = vsyncpa [#allocation3], 1

</llo_original>
